<compile_context>
chip_gen: v6e
topology: v6e:2x2x1
jax: 0.10.0
libtpu: 0.0.40
codegen_flags: <defaults>
</compile_context>

<pallas_src>
import jax
import jax.numpy as jnp
from jax.experimental import pallas as pl
from jax.experimental.pallas import tpu as pltpu


def _round_up(x, m):
    return ((x + m - 1) // m) * m


def actor_mean_kernel(x_ref, w1_ref, b1_ref, w2_ref, b2_ref, w3_ref, b3_ref, o_ref):
    """One batch tile: mean = tanh(relu(relu(x@W1+b1)@W2+b2)@W3+b3).

    Weights are pre-transposed to (in, out); biases are (1, out) f32.
    All matmuls accumulate in f32 on the MXU.
    """
    x = x_ref[...].astype(w1_ref.dtype)

    h1 = jnp.dot(x, w1_ref[...], preferred_element_type=jnp.float32) + b1_ref[...]
    h1 = jnp.maximum(h1, 0.0).astype(w2_ref.dtype)

    h2 = jnp.dot(h1, w2_ref[...], preferred_element_type=jnp.float32) + b2_ref[...]
    h2 = jnp.maximum(h2, 0.0).astype(w3_ref.dtype)

    logits = jnp.dot(h2, w3_ref[...], preferred_element_type=jnp.float32) + b3_ref[...]
    o_ref[...] = jnp.tanh(logits).astype(o_ref.dtype)


def prepare_params(params, compute_dtype=jnp.float32, lane=128):
    """One-time layout prep (call OUTSIDE the per-step hot path).

    - Transposes PyTorch (out, in) weights to (in, out).
    - Pads the final layer to a multiple of 128 output lanes (lane-dense stores).
    - Reshapes biases to (1, out) for lane-aligned broadcast; biases stay f32.
    - Optionally casts weights to bf16 for v5e/v6e/v7x MXU-native matmuls.
    """
    w1, b1 = params["w1"], params["b1"]        # (h1, obs_dim), (h1,)
    w2, b2 = params["w2"], params["b2"]        # (h2, h1),      (h2,)
    w3, b3 = params["w3"], params["b3"]        # (action_dim, h2), (action_dim,)
    action_dim, h2 = w3.shape
    out_pad = _round_up(action_dim, lane)

    w3p = jnp.zeros((h2, out_pad), jnp.float32).at[:, :action_dim].set(w3.T)
    b3p = jnp.zeros((1, out_pad), jnp.float32).at[:, :action_dim].set(b3[None, :])

    return {
        "w1t": w1.T.astype(compute_dtype),
        "b1r": b1[None, :].astype(jnp.float32),
        "w2t": w2.T.astype(compute_dtype),
        "b2r": b2[None, :].astype(jnp.float32),
        "w3t": w3p.astype(compute_dtype),
        "b3r": b3p,
        "log_std": params["log_std"],          # (1, action_dim)
    }


def actor_forward(obs, prepared, *, block_batch=512):
    """obs: (B, obs_dim) f32.  prepared: output of prepare_params.  Returns (mean, std)."""
    B, obs_dim = obs.shape
    w1t, b1r = prepared["w1t"], prepared["b1r"]
    w2t, b2r = prepared["w2t"], prepared["b2r"]
    w3t, b3r = prepared["w3t"], prepared["b3r"]
    log_std = prepared["log_std"]
    action_dim = log_std.shape[-1]
    h1 = w1t.shape[1]
    h2 = w2t.shape[1]
    out_pad = w3t.shape[1]

    # Batch tile: multiple of 128 rows (v5e MXU rows / sublane tiling), sized for
    # v7x's 64 MiB VMEM (<=512 rows f32 with double-buffered obs/out blocks +
    # ~140 KiB resident weights).
    bm = min(block_batch, _round_up(B, 128))
    b_pad = _round_up(B, bm)
    obs_p = obs if b_pad == B else jnp.zeros((b_pad, obs_dim), obs.dtype).at[:B].set(obs)
    grid = (b_pad // bm,)

    def resident(shape):
        # Constant block index -> operand stays VMEM-resident across grid steps.
        return pl.BlockSpec(shape, lambda i: (0, 0))

    nbytes = lambda a: a.size * a.dtype.itemsize
    cost = pl.CostEstimate(
        flops=2 * b_pad * (obs_dim * h1 + h1 * h2 + h2 * out_pad),
        transcendentals=b_pad * out_pad,  # tanh
        bytes_accessed=(nbytes(obs_p)
                        + sum(nbytes(a) for a in (w1t, b1r, w2t, b2r, w3t, b3r))
                        + b_pad * out_pad * 4),
    )

    mean_pad = pl.pallas_call(
        actor_mean_kernel,
        out_shape=jax.ShapeDtypeStruct((b_pad, out_pad), jnp.float32),
        grid=grid,
        in_specs=[
            pl.BlockSpec((bm, obs_dim), lambda i: (i, 0)),
            resident(w1t.shape), resident(b1r.shape),
            resident(w2t.shape), resident(b2r.shape),
            resident(w3t.shape), resident(b3r.shape),
        ],
        out_specs=pl.BlockSpec((bm, out_pad), lambda i: (i, 0)),
        compiler_params=pltpu.CompilerParams(dimension_semantics=("parallel",)),
        cost_estimate=cost,
    )(obs_p, w1t, b1r, w2t, b2r, w3t, b3r)

    mean = mean_pad[:B, :action_dim]
    # std is a parameter-only function (PyTorch expand_as is a broadcast view):
    # clamp/exp on a (1, action_dim) vector, then broadcast. No kernel needed.
    std = jnp.broadcast_to(jnp.exp(jnp.clip(log_std, -20.0, 2.0)), (B, action_dim))
    return mean, std


def init_params(key, obs_dim, action_dim, hidden_1=128, hidden_2=128):
    """Deterministic init mirroring nn.Linear default (uniform +-1/sqrt(fan_in))."""
    ks = jax.random.split(key, 6)

    def linear(kw, kb, fan_in, fan_out):
        bound = 1.0 / jnp.sqrt(jnp.float32(fan_in))
        w = jax.random.uniform(kw, (fan_out, fan_in), jnp.float32, -bound, bound)
        b = jax.random.uniform(kb, (fan_out,), jnp.float32, -bound, bound)
        return w, b

    w1, b1 = linear(ks[0], ks[1], obs_dim, hidden_1)
    w2, b2 = linear(ks[2], ks[3], hidden_1, hidden_2)
    w3, b3 = linear(ks[4], ks[5], hidden_2, action_dim)
    log_std = jnp.zeros((1, action_dim), jnp.float32)  # nn.Parameter(torch.zeros(1, A))
    return {"w1": w1, "b1": b1, "w2": w2, "b2": b2, "w3": w3, "b3": b3,
            "log_std": log_std}


if __name__ == "__main__":
    key = jax.random.PRNGKey(0)
    k_obs, k_params = jax.random.split(key)

    batch, obs_dim, action_dim = 300, 16, 8   # non-multiple batch exercises padding
    hidden_1, hidden_2 = 128, 128

    obs = jax.random.normal(k_obs, (batch, obs_dim), jnp.float32)
    params = init_params(k_params, obs_dim, action_dim, hidden_1, hidden_2)

    # One-time layout prep (would live outside the PPO rollout hot loop).
    # For production on v5e/v6e/v7x pass compute_dtype=jnp.bfloat16.
    prepared = prepare_params(params, compute_dtype=jnp.float32)

    mean, std = actor_forward(obs, prepared, block_batch=128)  # grid=(3,)
    mean, std = jax.block_until_ready((mean, std))

    # Pure-JAX reference (PyTorch semantics).
    h1 = jax.nn.relu(obs @ params["w1"].T + params["b1"])
    h2 = jax.nn.relu(h1 @ params["w2"].T + params["b2"])
    mean_ref = jnp.tanh(h2 @ params["w3"].T + params["b3"])
    std_ref = jnp.broadcast_to(jnp.exp(jnp.clip(params["log_std"], -20.0, 2.0)),
                               (batch, action_dim))

    assert mean.shape == (batch, action_dim) and std.shape == (batch, action_dim)
    assert jnp.allclose(mean, mean_ref, atol=1e-5), "mean mismatch vs reference"
    assert jnp.allclose(std, std_ref, atol=1e-6), "std mismatch vs reference"

    print("KERNEL_OK")
</pallas_src>

<mosaic_0001>
module attributes {stable_mosaic.version = 11 : i64} {
  func.func @actor_mean_kernel(%arg0: i32, %arg1: memref<128x16xf32, #tpu.memory_space<vmem>>, %arg2: memref<16x128xf32, #tpu.memory_space<vmem>>, %arg3: memref<1x128xf32, #tpu.memory_space<vmem>>, %arg4: memref<128x128xf32, #tpu.memory_space<vmem>>, %arg5: memref<1x128xf32, #tpu.memory_space<vmem>>, %arg6: memref<128x128xf32, #tpu.memory_space<vmem>>, %arg7: memref<1x128xf32, #tpu.memory_space<vmem>>, %arg8: memref<128x128xf32, #tpu.memory_space<vmem>>) attributes {dimension_semantics = [#tpu.dimension_semantics<parallel>], iteration_bounds = array<i64: 3>, scalar_prefetch = 0 : i64, scratch_operands = 0 : i64, tpu.core_type = #tpu.core_type<tc>, window_params = [{transform_indices = @transform_0, window_bounds = array<i64: 128, 16>}, {pipeline_mode = #tpu.pipeline_mode<synchronous>, transform_indices = @transform_1, window_bounds = array<i64: 16, 128>}, {pipeline_mode = #tpu.pipeline_mode<synchronous>, transform_indices = @transform_2, window_bounds = array<i64: 1, 128>}, {pipeline_mode = #tpu.pipeline_mode<synchronous>, transform_indices = @transform_3, window_bounds = array<i64: 128, 128>}, {pipeline_mode = #tpu.pipeline_mode<synchronous>, transform_indices = @transform_4, window_bounds = array<i64: 1, 128>}, {pipeline_mode = #tpu.pipeline_mode<synchronous>, transform_indices = @transform_5, window_bounds = array<i64: 128, 128>}, {pipeline_mode = #tpu.pipeline_mode<synchronous>, transform_indices = @transform_6, window_bounds = array<i64: 1, 128>}, {transform_indices = @transform_7, window_bounds = array<i64: 128, 128>}]} {
    %c0 = arith.constant 0 : index
    %c0_0 = arith.constant 0 : index
    %0 = vector.load %arg1[%c0, %c0_0] : memref<128x16xf32, #tpu.memory_space<vmem>>, vector<128x16xf32>
    %c0_1 = arith.constant 0 : index
    %c0_2 = arith.constant 0 : index
    %1 = vector.load %arg2[%c0_1, %c0_2] : memref<16x128xf32, #tpu.memory_space<vmem>>, vector<16x128xf32>
    %cst = arith.constant dense<0.000000e+00> : vector<128x128xf32>
    %2 = tpu.matmul %0, %1, %cst {dimension_numbers = #tpu.dot_dimension_numbers<[1], [0], [0], [1], [0, 0, 1, 1], [], []>} : vector<128x16xf32>, vector<16x128xf32>, vector<128x128xf32> -> vector<128x128xf32>
    %c0_3 = arith.constant 0 : index
    %c0_4 = arith.constant 0 : index
    %3 = vector.load %arg3[%c0_3, %c0_4] : memref<1x128xf32, #tpu.memory_space<vmem>>, vector<1x128xf32>
    %4 = vector.broadcast %3 : vector<1x128xf32> to vector<128x128xf32>
    %5 = arith.addf %2, %4 : vector<128x128xf32>
    %cst_5 = arith.constant 0.000000e+00 : f32
    %6 = vector.broadcast %cst_5 : f32 to vector<128x128xf32>
    %7 = arith.maximumf %5, %6 : vector<128x128xf32>
    %c0_6 = arith.constant 0 : index
    %c0_7 = arith.constant 0 : index
    %8 = vector.load %arg4[%c0_6, %c0_7] : memref<128x128xf32, #tpu.memory_space<vmem>>, vector<128x128xf32>
    %cst_8 = arith.constant dense<0.000000e+00> : vector<128x128xf32>
    %9 = tpu.matmul %7, %8, %cst_8 {dimension_numbers = #tpu.dot_dimension_numbers<[1], [0], [0], [1], [0, 0, 1, 1], [], []>} : vector<128x128xf32>, vector<128x128xf32>, vector<128x128xf32> -> vector<128x128xf32>
    %c0_9 = arith.constant 0 : index
    %c0_10 = arith.constant 0 : index
    %10 = vector.load %arg5[%c0_9, %c0_10] : memref<1x128xf32, #tpu.memory_space<vmem>>, vector<1x128xf32>
    %11 = vector.broadcast %10 : vector<1x128xf32> to vector<128x128xf32>
    %12 = arith.addf %9, %11 : vector<128x128xf32>
    %cst_11 = arith.constant 0.000000e+00 : f32
    %13 = vector.broadcast %cst_11 : f32 to vector<128x128xf32>
    %14 = arith.maximumf %12, %13 : vector<128x128xf32>
    %c0_12 = arith.constant 0 : index
    %c0_13 = arith.constant 0 : index
    %15 = vector.load %arg6[%c0_12, %c0_13] : memref<128x128xf32, #tpu.memory_space<vmem>>, vector<128x128xf32>
    %cst_14 = arith.constant dense<0.000000e+00> : vector<128x128xf32>
    %16 = tpu.matmul %14, %15, %cst_14 {dimension_numbers = #tpu.dot_dimension_numbers<[1], [0], [0], [1], [0, 0, 1, 1], [], []>} : vector<128x128xf32>, vector<128x128xf32>, vector<128x128xf32> -> vector<128x128xf32>
    %c0_15 = arith.constant 0 : index
    %c0_16 = arith.constant 0 : index
    %17 = vector.load %arg7[%c0_15, %c0_16] : memref<1x128xf32, #tpu.memory_space<vmem>>, vector<1x128xf32>
    %18 = vector.broadcast %17 : vector<1x128xf32> to vector<128x128xf32>
    %19 = arith.addf %16, %18 : vector<128x128xf32>
    %20 = math.tanh %19 : vector<128x128xf32>
    %c0_17 = arith.constant 0 : index
    %c0_18 = arith.constant 0 : index
    %21 = vector.load %arg8[%c0_17, %c0_18] : memref<128x128xf32, #tpu.memory_space<vmem>>, vector<128x128xf32>
    tpu.vector_store %arg8[%c0_17, %c0_18], %20 {strides = array<i32>} : memref<128x128xf32, #tpu.memory_space<vmem>>, vector<128x128xf32>,
    return
  }
  func.func @transform_0(%arg0: i32) -> (i32, i32) {
    %c0_i32 = arith.constant 0 : i32
    %c0_i32_0 = arith.constant 0 : i32
    return %arg0, %c0_i32 : i32, i32
  }
  func.func @transform_1(%arg0: i32) -> (i32, i32) {
    %c0_i32 = arith.constant 0 : i32
    %c0_i32_0 = arith.constant 0 : i32
    %c0_i32_1 = arith.constant 0 : i32
    return %c0_i32, %c0_i32_0 : i32, i32
  }
  func.func @transform_2(%arg0: i32) -> (i32, i32) {
    %c0_i32 = arith.constant 0 : i32
    %c0_i32_0 = arith.constant 0 : i32
    %c0_i32_1 = arith.constant 0 : i32
    return %c0_i32, %c0_i32_0 : i32, i32
  }
  func.func @transform_3(%arg0: i32) -> (i32, i32) {
    %c0_i32 = arith.constant 0 : i32
    %c0_i32_0 = arith.constant 0 : i32
    %c0_i32_1 = arith.constant 0 : i32
    return %c0_i32, %c0_i32_0 : i32, i32
  }
  func.func @transform_4(%arg0: i32) -> (i32, i32) {
    %c0_i32 = arith.constant 0 : i32
    %c0_i32_0 = arith.constant 0 : i32
    %c0_i32_1 = arith.constant 0 : i32
    return %c0_i32, %c0_i32_0 : i32, i32
  }
  func.func @transform_5(%arg0: i32) -> (i32, i32) {
    %c0_i32 = arith.constant 0 : i32
    %c0_i32_0 = arith.constant 0 : i32
    %c0_i32_1 = arith.constant 0 : i32
    return %c0_i32, %c0_i32_0 : i32, i32
  }
  func.func @transform_6(%arg0: i32) -> (i32, i32) {
    %c0_i32 = arith.constant 0 : i32
    %c0_i32_0 = arith.constant 0 : i32
    %c0_i32_1 = arith.constant 0 : i32
    return %c0_i32, %c0_i32_0 : i32, i32
  }
  func.func @transform_7(%arg0: i32) -> (i32, i32) {
    %c0_i32 = arith.constant 0 : i32
    %c0_i32_0 = arith.constant 0 : i32
    return %arg0, %c0_i32 : i32, i32
  }
}

</mosaic_0001>

<llo_original>
// kernel: tpu_custom_call.1
$region0: #{tpu_custom_call.1}
  #allocation0 [shape = 'u32[]', space=smem, size = 0x4, offset = 0x4, fixed_abs, tag = 'smem constant byte address 0x4 - core index']
  #allocation1 [shape = 'u32[144,128]{1,0:T(1,128)}', space=vmem, size = 0x12000, scoped, tag = 'internal scratch']
  %s0 = inlined_call_operand.vmem [shape: f32[384,16], index: 0, kind: input, shape index: {}]
  %s1 = inlined_call_operand.vmem [shape: f32[16,128], index: 1, kind: input, shape index: {}]
  %s2 = inlined_call_operand.vmem [shape: f32[1,128], index: 2, kind: input, shape index: {}]
  %s3 = inlined_call_operand.vmem [shape: f32[128,128], index: 3, kind: input, shape index: {}]
  %s4 = inlined_call_operand.vmem [shape: f32[1,128], index: 4, kind: input, shape index: {}]
  %s5 = inlined_call_operand.vmem [shape: f32[128,128], index: 5, kind: input, shape index: {}]
  %s6 = inlined_call_operand.vmem [shape: f32[1,128], index: 6, kind: input, shape index: {}]
  %s7 = inlined_call_operand.hbm [shape: f32[384,128], index: 7, kind: output, shape index: {}]
  %s8 = sld [smem:[#allocation0]]
  $region61: #{tpu_custom_call.1} parent=0
    _
  %s10 = ssub.s32 1, %s8
  %s11 = scalar_select 0, %s10, %s8
  $region1: #{tpu_custom_call.1} parent=0
    #allocation2 [shape = 'u8[131072]{0}', space=vmem, size = 0x20000, scoped, tag = 'output window, operand 0']
    #allocation3 [shape = 's32[2]{0}', space=sflag, size = 0x8, scoped, tag = 'scoped memory for tpu_custom_call.1']
    %12 = vsyncpa [#allocation3], 0
    %s13 = scalar_lea.sflag [#allocation3], 1
    %14 = vsyncpa %s13, 0
    loop: start=0, step=1, limit=5
    $region2: #{tpu_custom_call.1} parent=1 // loop_pre_header
      _
    $region3: #{tpu_custom_call.1} parent=1 // loop_header
      %s16 = sphi 0, %s20
      %p17 = scmp.ge.s32.totalorder %s16, 5
      %s26 = sphi 0, %s28
      %s29 = sphi 0, %s26
      %s30 = sphi 0, %s29
      %s46 = sphi 0, %s30
      %s50 = sphi 0, %s50
      %s52 = sphi 0, %s50
      %s53 = sphi 0, %s52
      %s67 = sphi 0, %s53
      %s71 = sphi 0, %s71
      %s73 = sphi 0, %s71
      %s74 = sphi 0, %s73
      %s88 = sphi 0, %s74
      %s92 = sphi 0, %s92
      %s94 = sphi 0, %s92
      %s95 = sphi 0, %s94
      %s109 = sphi 0, %s95
      %s113 = sphi 0, %s113
      %s115 = sphi 0, %s113
      %s116 = sphi 0, %s115
      %s130 = sphi 0, %s116
      %s134 = sphi 0, %s134
      %s136 = sphi 0, %s134
      %s137 = sphi 0, %s136
      %s151 = sphi 0, %s137
      %s155 = sphi 0, %s155
      %s157 = sphi 0, %s155
      %s158 = sphi 0, %s157
      %s172 = sphi 0, %s158
      %s178 = sphi 0, %s180
      %s181 = sphi 0, %s178
      %s182 = sphi 0, %s181
      %s198 = sphi 0, %s182
    $region4: #{tpu_custom_call.1} parent=1 // loop_header_branch
      %19 = sbr.rel (%p17) target = $region8
    $region5: #{tpu_custom_call.1} parent=1 // loop_body
      %s21 = ssub.s32 %s16, 1
      %s22 = ssub.s32 %s16, 2
      %s23 = sadd.s32 %s16, 1
      %s24 = ssub.s32 %s16, %s23
      %p25 = scmp.eq.s32.totalorder %s24, 0
      %s27 = sadd.s32 %s26, 1
      %s28 = scalar_select %p25, %s26, %s27
      %p31 = pneg %p25
      %p32 = scmp.eq.s32.totalorder %s16, 2
      %p33 = por %p31, %p32
      %p34 = scmp.ne.s32.totalorder %s26, %s29
      %p35 = scmp.eq.s32.totalorder %s16, 0
      %p36 = por %p34, %p35
      %p37 = scmp.ne.s32.totalorder %s26, %s29
      %p38 = scmp.eq.s32.totalorder %s21, 2
      %p39 = por %p37, %p38
      %p40 = scmp.ne.s32.totalorder %s29, %s30
      %p41 = scmp.eq.s32.totalorder %s21, 0
      %p42 = por %p40, %p41
      %p43 = scmp.ne.s32.totalorder %s29, %s30
      %p44 = scmp.eq.s32.totalorder %s22, 2
      %p45 = por %p43, %p44
      %p47 = scmp.ne.s32.totalorder %s30, %s46
      %p48 = scmp.eq.s32.totalorder %s22, 0
      %p49 = por %p47, %p48
      %s51 = sadd.s32 %s50, 1
      %p54 = scmp.eq.s32.totalorder %s16, 2
      %p55 = scmp.ne.s32.totalorder %s50, %s52
      %p56 = scmp.eq.s32.totalorder %s16, 0
      %p57 = por %p55, %p56
      %p58 = scmp.ne.s32.totalorder %s50, %s52
      %p59 = scmp.eq.s32.totalorder %s21, 2
      %p60 = por %p58, %p59
      %p61 = scmp.ne.s32.totalorder %s52, %s53
      %p62 = scmp.eq.s32.totalorder %s21, 0
      %p63 = por %p61, %p62
      %p64 = scmp.ne.s32.totalorder %s52, %s53
      %p65 = scmp.eq.s32.totalorder %s22, 2
      %p66 = por %p64, %p65
      %p68 = scmp.ne.s32.totalorder %s53, %s67
      %p69 = scmp.eq.s32.totalorder %s22, 0
      %p70 = por %p68, %p69
      %s72 = sadd.s32 %s71, 1
      %p75 = scmp.eq.s32.totalorder %s16, 2
      %p76 = scmp.ne.s32.totalorder %s71, %s73
      %p77 = scmp.eq.s32.totalorder %s16, 0
      %p78 = por %p76, %p77
      %p79 = scmp.ne.s32.totalorder %s71, %s73
      %p80 = scmp.eq.s32.totalorder %s21, 2
      %p81 = por %p79, %p80
      %p82 = scmp.ne.s32.totalorder %s73, %s74
      %p83 = scmp.eq.s32.totalorder %s21, 0
      %p84 = por %p82, %p83
      %p85 = scmp.ne.s32.totalorder %s73, %s74
      %p86 = scmp.eq.s32.totalorder %s22, 2
      %p87 = por %p85, %p86
      %p89 = scmp.ne.s32.totalorder %s74, %s88
      %p90 = scmp.eq.s32.totalorder %s22, 0
      %p91 = por %p89, %p90
      %s93 = sadd.s32 %s92, 1
      %p96 = scmp.eq.s32.totalorder %s16, 2
      %p97 = scmp.ne.s32.totalorder %s92, %s94
      %p98 = scmp.eq.s32.totalorder %s16, 0
      %p99 = por %p97, %p98
      %p100 = scmp.ne.s32.totalorder %s92, %s94
      %p101 = scmp.eq.s32.totalorder %s21, 2
      %p102 = por %p100, %p101
      %p103 = scmp.ne.s32.totalorder %s94, %s95
      %p104 = scmp.eq.s32.totalorder %s21, 0
      %p105 = por %p103, %p104
      %p106 = scmp.ne.s32.totalorder %s94, %s95
      %p107 = scmp.eq.s32.totalorder %s22, 2
      %p108 = por %p106, %p107
      %p110 = scmp.ne.s32.totalorder %s95, %s109
      %p111 = scmp.eq.s32.totalorder %s22, 0
      %p112 = por %p110, %p111
      %s114 = sadd.s32 %s113, 1
      %p117 = scmp.eq.s32.totalorder %s16, 2
      %p118 = scmp.ne.s32.totalorder %s113, %s115
      %p119 = scmp.eq.s32.totalorder %s16, 0
      %p120 = por %p118, %p119
      %p121 = scmp.ne.s32.totalorder %s113, %s115
      %p122 = scmp.eq.s32.totalorder %s21, 2
      %p123 = por %p121, %p122
      %p124 = scmp.ne.s32.totalorder %s115, %s116
      %p125 = scmp.eq.s32.totalorder %s21, 0
      %p126 = por %p124, %p125
      %p127 = scmp.ne.s32.totalorder %s115, %s116
      %p128 = scmp.eq.s32.totalorder %s22, 2
      %p129 = por %p127, %p128
      %p131 = scmp.ne.s32.totalorder %s116, %s130
      %p132 = scmp.eq.s32.totalorder %s22, 0
      %p133 = por %p131, %p132
      %s135 = sadd.s32 %s134, 1
      %p138 = scmp.eq.s32.totalorder %s16, 2
      %p139 = scmp.ne.s32.totalorder %s134, %s136
      %p140 = scmp.eq.s32.totalorder %s16, 0
      %p141 = por %p139, %p140
      %p142 = scmp.ne.s32.totalorder %s134, %s136
      %p143 = scmp.eq.s32.totalorder %s21, 2
      %p144 = por %p142, %p143
      %p145 = scmp.ne.s32.totalorder %s136, %s137
      %p146 = scmp.eq.s32.totalorder %s21, 0
      %p147 = por %p145, %p146
      %p148 = scmp.ne.s32.totalorder %s136, %s137
      %p149 = scmp.eq.s32.totalorder %s22, 2
      %p150 = por %p148, %p149
      %p152 = scmp.ne.s32.totalorder %s137, %s151
      %p153 = scmp.eq.s32.totalorder %s22, 0
      %p154 = por %p152, %p153
      %s156 = sadd.s32 %s155, 1
      %p159 = scmp.eq.s32.totalorder %s16, 2
      %p160 = scmp.ne.s32.totalorder %s155, %s157
      %p161 = scmp.eq.s32.totalorder %s16, 0
      %p162 = por %p160, %p161
      %p163 = scmp.ne.s32.totalorder %s155, %s157
      %p164 = scmp.eq.s32.totalorder %s21, 2
      %p165 = por %p163, %p164
      %p166 = scmp.ne.s32.totalorder %s157, %s158
      %p167 = scmp.eq.s32.totalorder %s21, 0
      %p168 = por %p166, %p167
      %p169 = scmp.ne.s32.totalorder %s157, %s158
      %p170 = scmp.eq.s32.totalorder %s22, 2
      %p171 = por %p169, %p170
      %p173 = scmp.ne.s32.totalorder %s158, %s172
      %p174 = scmp.eq.s32.totalorder %s22, 0
      %p175 = por %p173, %p174
      %s176 = ssub.s32 %s16, %s23
      %p177 = scmp.eq.s32.totalorder %s176, 0
      %s179 = sadd.s32 %s178, 1
      %s180 = scalar_select %p177, %s178, %s179
      %p183 = pneg %p177
      %p184 = scmp.eq.s32.totalorder %s16, 2
      %p185 = por %p183, %p184
      %p186 = scmp.ne.s32.totalorder %s178, %s181
      %p187 = scmp.eq.s32.totalorder %s16, 0
      %p188 = por %p186, %p187
      %p189 = scmp.ne.s32.totalorder %s178, %s181
      %p190 = scmp.eq.s32.totalorder %s21, 2
      %p191 = por %p189, %p190
      %p192 = scmp.ne.s32.totalorder %s181, %s182
      %p193 = scmp.eq.s32.totalorder %s21, 0
      %p194 = por %p192, %p193
      %p195 = scmp.ne.s32.totalorder %s181, %s182
      %p196 = scmp.eq.s32.totalorder %s22, 2
      %p197 = por %p195, %p196
      %p199 = scmp.ne.s32.totalorder %s182, %s198
      %p200 = scmp.eq.s32.totalorder %s22, 0
      %p201 = por %p199, %p200
      %p202 = scmp.le.s32.totalorder 1, %s16
      %p203 = scmp.lt.s32.totalorder %s16, 4
      %p204 = pnand %p202, %p203
      %p205 = pneg %p204
      // Predicated region
      $region9: #{tpu_custom_call.1} parent=5 // pred_check
        _
      $region10: #{tpu_custom_call.1} parent=5 // pred_check_branch
        %207 = sbr.rel (%p204) target = $region12
      $region11: #{tpu_custom_call.1} parent=5 // pred_region
        %s208 = ssub.s32 %s16, 1
        // Predicated region
        $region13: #{tpu_custom_call.1} parent=11 // pred_check
          %p209 = pneg %p63
        $region14: #{tpu_custom_call.1} parent=11 // pred_check_branch
          %211 = sbr.rel (%p209) target = $region16
        $region15: #{tpu_custom_call.1} parent=11 // pred_region
          _
        $region16: #{tpu_custom_call.1} parent=11 // pred_fallthru
          _
        // Predicated region
        $region17: #{tpu_custom_call.1} parent=11 // pred_check
          %p212 = pneg %p84
        $region18: #{tpu_custom_call.1} parent=11 // pred_check_branch
          %214 = sbr.rel (%p212) target = $region20
        $region19: #{tpu_custom_call.1} parent=11 // pred_region
          _
        $region20: #{tpu_custom_call.1} parent=11 // pred_fallthru
          _
        // Predicated region
        $region21: #{tpu_custom_call.1} parent=11 // pred_check
          %p215 = pneg %p105
        $region22: #{tpu_custom_call.1} parent=11 // pred_check_branch
          %217 = sbr.rel (%p215) target = $region24
        $region23: #{tpu_custom_call.1} parent=11 // pred_region
          _
        $region24: #{tpu_custom_call.1} parent=11 // pred_fallthru
          _
        // Predicated region
        $region25: #{tpu_custom_call.1} parent=11 // pred_check
          %p218 = pneg %p126
        $region26: #{tpu_custom_call.1} parent=11 // pred_check_branch
          %220 = sbr.rel (%p218) target = $region28
        $region27: #{tpu_custom_call.1} parent=11 // pred_region
          _
        $region28: #{tpu_custom_call.1} parent=11 // pred_fallthru
          _
        // Predicated region
        $region29: #{tpu_custom_call.1} parent=11 // pred_check
          %p221 = pneg %p147
        $region30: #{tpu_custom_call.1} parent=11 // pred_check_branch
          %223 = sbr.rel (%p221) target = $region32
        $region31: #{tpu_custom_call.1} parent=11 // pred_region
          _
        $region32: #{tpu_custom_call.1} parent=11 // pred_fallthru
          _
        // Predicated region
        $region33: #{tpu_custom_call.1} parent=11 // pred_check
          %p224 = pneg %p168
        $region34: #{tpu_custom_call.1} parent=11 // pred_check_branch
          %226 = sbr.rel (%p224) target = $region36
        $region35: #{tpu_custom_call.1} parent=11 // pred_region
          _
        $region36: #{tpu_custom_call.1} parent=11 // pred_fallthru
          _
      $region12: #{tpu_custom_call.1} parent=5 // pred_fallthru
        _
      %p227 = scmp.lt.s32.totalorder %s16, 3
      // Predicated region
      $region37: #{tpu_custom_call.1} parent=5 // pred_check
        %p228 = pneg %p227
      $region38: #{tpu_custom_call.1} parent=5 // pred_check_branch
        %230 = sbr.rel (%p228) target = $region40
      $region39: #{tpu_custom_call.1} parent=5 // pred_region
        // Predicated region
        $region41: #{tpu_custom_call.1} parent=39 // pred_check
          %p231 = pneg %p36
        $region42: #{tpu_custom_call.1} parent=39 // pred_check_branch
          %233 = sbr.rel (%p231) target = $region44
        $region43: #{tpu_custom_call.1} parent=39 // pred_region
          %s234 = smul.u32 16, %s16
          %p235 = scmp.lt.s32.totalorder %s234, 47
          %s236 = scalar_select %p235, %s234, 47
          %s237 = smul.addr %s236, 8
          %s238 = scalar_lea.vmem %s0, %s237
          %s239 = smul.u32 16, %s16
        $region44: #{tpu_custom_call.1} parent=39 // pred_fallthru
          _
      $region40: #{tpu_custom_call.1} parent=5 // pred_fallthru
        _
      %p240 = scmp.le.s32.totalorder 1, %s16
      %p241 = scmp.lt.s32.totalorder %s16, 4
      %p242 = pnand %p240, %p241
      %p243 = pneg %p242
      // Predicated region
      $region45: #{tpu_custom_call.1} parent=5 // pred_check
        _
      $region46: #{tpu_custom_call.1} parent=5 // pred_check_branch
        %245 = sbr.rel (%p242) target = $region48
      $region47: #{tpu_custom_call.1} parent=5 // pred_region
        %s246 = ssub.s32 %s16, 1
        %s247 = smul.u32 16, %s21
        %p248 = scmp.lt.s32.totalorder %s247, 47
        %s249 = scalar_select %p248, %s247, 47
        %s250 = smul.addr %s249, 8
        %s251 = scalar_lea.vmem %s0, %s250
        %p252 = pneg %p42
        %p253 = pneg %p39
        %p254 = pneg %p63
        %p255 = pneg %p60
        %p256 = pneg %p84
        %p257 = pneg %p81
        %p258 = pneg %p105
        %p259 = pneg %p102
        %p260 = pneg %p126
        %p261 = pneg %p123
        %p262 = pneg %p147
        %p263 = pneg %p144
        %p264 = pneg %p168
        %p265 = pneg %p165
        %p266 = pneg %p194
        %p267 = pneg %p191
        %s268 = sand.u32 %s181, 1
        %s269 = scalar_lea.sflag [#allocation3], %s268
        %s270 = sand.u32 %s181, 1
        %s271 = smul.addr %s270, 128
        %s272 = scalar_lea.vmem [#allocation2], %s271
        %s273 = smul.u32 16, %s21
        %p274 = scmp.lt.s32.totalorder %s273, 47
        %s275 = scalar_select %p274, %s273, 47
        %s276 = smul.addr %s275, 8
        %s277 = scalar_lea.vmem %s0, %s276
        %s278 = smul.u32 16, %s21
        %s279 = smul.u32 16, %s21
        %v280 = vld [vmem:[%s277] sm:$0xff]
        %v281 = vld [vmem:[%s277 + $0x8] sm:$0xff]
        %v282 = vld [vmem:[%s277 + $0x10] sm:$0xff]
        %v283 = vld [vmem:[%s277 + $0x18] sm:$0xff]
        %v284 = vld [vmem:[%s277 + $0x20] sm:$0xff]
        %v285 = vld [vmem:[%s277 + $0x28] sm:$0xff]
        %v286 = vld [vmem:[%s277 + $0x30] sm:$0xff]
        %v287 = vld [vmem:[%s277 + $0x38] sm:$0xff]
        %v288 = vld [vmem:[%s277 + $0x40] sm:$0xff]
        %v289 = vld [vmem:[%s277 + $0x48] sm:$0xff]
        %v290 = vld [vmem:[%s277 + $0x50] sm:$0xff]
        %v291 = vld [vmem:[%s277 + $0x58] sm:$0xff]
        %v292 = vld [vmem:[%s277 + $0x60] sm:$0xff]
        %v293 = vld [vmem:[%s277 + $0x68] sm:$0xff]
        %v294 = vld [vmem:[%s277 + $0x70] sm:$0xff]
        %v295 = vld [vmem:[%s277 + $0x78] sm:$0xff]
        %v296 = vld [vmem:[%s1] sm:$0xff]
        %v297 = vld [vmem:[%s1 + $0x8] sm:$0xff]
        %v298 = vld [vmem:[%s2] sm:$0x1]
        %v300 = vlaneseq
        %v301 = vshrl.u32 %v300, 7
        %v302 = vsub.s32 0, %v301
        %v303 = vrot.slane %v298, %v302
        %vm305 = vcmask 130048
        %v307 = vsel %vm305, %v280, 0
        %v310 = vsel %vm305, %v281, 0
        %v313 = vsel %vm305, %v282, 0
        %v316 = vsel %vm305, %v283, 0
        %v319 = vsel %vm305, %v284, 0
        %v322 = vsel %vm305, %v285, 0
        %v325 = vsel %vm305, %v286, 0
        %v328 = vsel %vm305, %v287, 0
        %v331 = vsel %vm305, %v288, 0
        %v334 = vsel %vm305, %v289, 0
        %v337 = vsel %vm305, %v290, 0
        %v340 = vsel %vm305, %v291, 0
        %v343 = vsel %vm305, %v292, 0
        %v346 = vsel %vm305, %v293, 0
        %v349 = vsel %vm305, %v294, 0
        %v352 = vsel %vm305, %v295, 0
        %354 = vmatprep.subr.mxu0 0.0
        %355 = vmatpush1.msra.mxu0 0.0
        %356 = vmatprep.subr.mxu0 0.0
        %357 = vmatpush1.msra.mxu0 0.0
        %358 = vmatprep.subr.mxu0 0.0
        %359 = vmatpush1.msra.mxu0 0.0
        %360 = vmatprep.subr.mxu0 0.0
        %361 = vmatpush1.msra.mxu0 0.0
        %362 = vmatprep.subr.mxu0 0.0
        %363 = vmatpush1.msra.mxu0 0.0
        %364 = vmatprep.subr.mxu0 0.0
        %365 = vmatpush1.msra.mxu0 0.0
        %366 = vmatprep.subr.mxu0 0.0
        %367 = vmatpush1.msra.mxu0 0.0
        %368 = vmatprep.subr.mxu0 0.0
        %369 = vmatpush1.msra.mxu0 0.0
        %370 = vmatprep.subr.mxu0 0.0
        %371 = vmatpush1.msra.mxu0 0.0
        %372 = vmatprep.subr.mxu0 0.0
        %373 = vmatpush1.msra.mxu0 0.0
        %374 = vmatprep.subr.mxu0 0.0
        %375 = vmatpush1.msra.mxu0 0.0
        %376 = vmatprep.subr.mxu0 0.0
        %377 = vmatpush1.msra.mxu0 0.0
        %378 = vmatprep.subr.mxu0 0.0
        %379 = vmatpush1.msra.mxu0 0.0
        %380 = vmatprep.subr.mxu0 0.0
        %381 = vmatpush1.msra.mxu0 0.0
        %382 = vmatprep.subr.mxu0 0.0
        %383 = vmatpush1.msra.mxu0 %v297
        %384 = vmatprep.subr.mxu0 0.0
        %385 = vmatpush1.msra.mxu0 %v296
        %386 = vmatprep.subr.mxu0 0.0
        %387 = vmatpush2.msra.mxu0 0.0
        %388 = vmatprep.subr.mxu0 0.0
        %389 = vmatpush2.msra.mxu0 0.0
        %390 = vmatprep.subr.mxu0 0.0
        %391 = vmatpush2.msra.mxu0 0.0
        %392 = vmatprep.subr.mxu0 0.0
        %393 = vmatpush2.msra.mxu0 0.0
        %394 = vmatprep.subr.mxu0 0.0
        %395 = vmatpush2.msra.mxu0 0.0
        %396 = vmatprep.subr.mxu0 0.0
        %397 = vmatpush2.msra.mxu0 0.0
        %398 = vmatprep.subr.mxu0 0.0
        %399 = vmatpush2.msra.mxu0 0.0
        %400 = vmatprep.subr.mxu0 0.0
        %401 = vmatpush2.msra.mxu0 0.0
        %402 = vmatprep.subr.mxu0 0.0
        %403 = vmatpush2.msra.mxu0 0.0
        %404 = vmatprep.subr.mxu0 0.0
        %405 = vmatpush2.msra.mxu0 0.0
        %406 = vmatprep.subr.mxu0 0.0
        %407 = vmatpush2.msra.mxu0 0.0
        %408 = vmatprep.subr.mxu0 0.0
        %409 = vmatpush2.msra.mxu0 0.0
        %410 = vmatprep.subr.mxu0 0.0
        %411 = vmatpush2.msra.mxu0 0.0
        %412 = vmatprep.subr.mxu0 0.0
        %413 = vmatpush2.msra.mxu0 0.0
        %414 = vmatprep.subr.mxu0 0.0
        %415 = vmatpush2.msra.mxu0 0.0
        %416 = vmatprep.subr.mxu0 0.0
        %417 = vmatpush2.msra.mxu0 0.0
        %418 = vmatprep.mubr.f32.mxu0 0.0
        %419 = vmatmul.mubr.f32.gmra.mxu0 %v307
        %v420 = vpop.f32.mrf.mxu0
        %v421 = vadd.f32 %v303, %v420
        %v422 = vpop.f32.mrf.mxu0
        %423 = vmatprep.mubr.f32.mxu0 0.0
        %424 = vmatmul.mubr.f32.gmra.mxu0 %v310
        %v425 = vpop.f32.mrf.mxu0
        %v426 = vadd.f32 %v303, %v425
        %v427 = vpop.f32.mrf.mxu0
        %428 = vmatprep.mubr.f32.mxu0 0.0
        %429 = vmatmul.mubr.f32.gmra.mxu0 %v313
        %v430 = vpop.f32.mrf.mxu0
        %v431 = vadd.f32 %v303, %v430
        %v432 = vpop.f32.mrf.mxu0
        %433 = vmatprep.mubr.f32.mxu0 0.0
        %434 = vmatmul.mubr.f32.gmra.mxu0 %v316
        %v435 = vpop.f32.mrf.mxu0
        %v436 = vadd.f32 %v303, %v435
        %v437 = vpop.f32.mrf.mxu0
        %438 = vmatprep.mubr.f32.mxu0 0.0
        %439 = vmatmul.mubr.f32.gmra.mxu0 %v319
        %v440 = vpop.f32.mrf.mxu0
        %v441 = vadd.f32 %v303, %v440
        %v442 = vpop.f32.mrf.mxu0
        %443 = vmatprep.mubr.f32.mxu0 0.0
        %444 = vmatmul.mubr.f32.gmra.mxu0 %v322
        %v445 = vpop.f32.mrf.mxu0
        %v446 = vadd.f32 %v303, %v445
        %v447 = vpop.f32.mrf.mxu0
        %448 = vmatprep.mubr.f32.mxu0 0.0
        %449 = vmatmul.mubr.f32.gmra.mxu0 %v325
        %v450 = vpop.f32.mrf.mxu0
        %v451 = vadd.f32 %v303, %v450
        %v452 = vpop.f32.mrf.mxu0
        %453 = vmatprep.mubr.f32.mxu0 0.0
        %454 = vmatmul.mubr.f32.gmra.mxu0 %v328
        %v455 = vpop.f32.mrf.mxu0
        %v456 = vadd.f32 %v303, %v455
        %v457 = vpop.f32.mrf.mxu0
        %458 = vmatprep.mubr.f32.mxu0 0.0
        %459 = vmatmul.mubr.f32.gmra.mxu0 %v331
        %v460 = vpop.f32.mrf.mxu0
        %v461 = vadd.f32 %v303, %v460
        %v462 = vpop.f32.mrf.mxu0
        %463 = vmatprep.mubr.f32.mxu0 0.0
        %464 = vmatmul.mubr.f32.gmra.mxu0 %v334
        %v465 = vpop.f32.mrf.mxu0
        %v466 = vadd.f32 %v303, %v465
        %v467 = vpop.f32.mrf.mxu0
        %468 = vmatprep.mubr.f32.mxu0 0.0
        %469 = vmatmul.mubr.f32.gmra.mxu0 %v337
        %v470 = vpop.f32.mrf.mxu0
        %v471 = vadd.f32 %v303, %v470
        %v472 = vpop.f32.mrf.mxu0
        %473 = vmatprep.mubr.f32.mxu0 0.0
        %474 = vmatmul.mubr.f32.gmra.mxu0 %v340
        %v475 = vpop.f32.mrf.mxu0
        %v476 = vadd.f32 %v303, %v475
        %v477 = vpop.f32.mrf.mxu0
        %478 = vmatprep.mubr.f32.mxu0 0.0
        %479 = vmatmul.mubr.f32.gmra.mxu0 %v343
        %v480 = vpop.f32.mrf.mxu0
        %v481 = vadd.f32 %v303, %v480
        %v482 = vpop.f32.mrf.mxu0
        %483 = vmatprep.mubr.f32.mxu0 0.0
        %484 = vmatmul.mubr.f32.gmra.mxu0 %v346
        %v485 = vpop.f32.mrf.mxu0
        %v486 = vadd.f32 %v303, %v485
        %v487 = vpop.f32.mrf.mxu0
        %488 = vmatprep.mubr.f32.mxu0 0.0
        %489 = vmatmul.mubr.f32.gmra.mxu0 %v349
        %v490 = vpop.f32.mrf.mxu0
        %v491 = vadd.f32 %v303, %v490
        %v492 = vpop.f32.mrf.mxu0
        %493 = vmatprep.mubr.f32.mxu0 0.0
        %494 = vmatmul.mubr.f32.gmra.mxu0 %v352
        %v495 = vpop.f32.mrf.mxu0
        %v496 = vadd.f32 %v303, %v495
        %v497 = vpop.f32.mrf.mxu0
        %498 = vdwg.mxu0
        %v499 = vmax.f32 %v421, 0.0
        %v500 = vmax.f32 %v426, 0.0
        %v501 = vmax.f32 %v431, 0.0
        %v502 = vmax.f32 %v436, 0.0
        %v503 = vmax.f32 %v441, 0.0
        %v504 = vmax.f32 %v446, 0.0
        %v505 = vmax.f32 %v451, 0.0
        %v506 = vmax.f32 %v456, 0.0
        %v507 = vmax.f32 %v461, 0.0
        %v508 = vmax.f32 %v466, 0.0
        %v509 = vmax.f32 %v471, 0.0
        %v510 = vmax.f32 %v476, 0.0
        %v511 = vmax.f32 %v481, 0.0
        %v512 = vmax.f32 %v486, 0.0
        %v513 = vmax.f32 %v491, 0.0
        %v514 = vmax.f32 %v496, 0.0
        %v515 = vld [vmem:[%s3] sm:$0xff]
        %v516 = vld [vmem:[%s3 + $0x8] sm:$0xff]
        %v517 = vld [vmem:[%s3 + $0x10] sm:$0xff]
        %v518 = vld [vmem:[%s3 + $0x18] sm:$0xff]
        %v519 = vld [vmem:[%s3 + $0x20] sm:$0xff]
        %v520 = vld [vmem:[%s3 + $0x28] sm:$0xff]
        %v521 = vld [vmem:[%s3 + $0x30] sm:$0xff]
        %v522 = vld [vmem:[%s3 + $0x38] sm:$0xff]
        %v523 = vld [vmem:[%s3 + $0x40] sm:$0xff]
        %v524 = vld [vmem:[%s3 + $0x48] sm:$0xff]
        %v525 = vld [vmem:[%s3 + $0x50] sm:$0xff]
        %v526 = vld [vmem:[%s3 + $0x58] sm:$0xff]
        %v527 = vld [vmem:[%s3 + $0x60] sm:$0xff]
        %v528 = vld [vmem:[%s3 + $0x68] sm:$0xff]
        %v529 = vld [vmem:[%s3 + $0x70] sm:$0xff]
        %v530 = vld [vmem:[%s3 + $0x78] sm:$0xff]
        %v531 = vld [vmem:[%s4] sm:$0x1]
        %v533 = vlaneseq
        %v534 = vshrl.u32 %v533, 7
        %v535 = vsub.s32 0, %v534
        %v536 = vrot.slane %v531, %v535
        %538 = vmatprep.subr.mxu0 0.0
        %539 = vmatpush1.msra.mxu0 %v530
        %540 = vmatprep.subr.mxu0 0.0
        %541 = vmatpush1.msra.mxu0 %v529
        %542 = vmatprep.subr.mxu0 0.0
        %543 = vmatpush1.msra.mxu0 %v528
        %544 = vmatprep.subr.mxu0 0.0
        %545 = vmatpush1.msra.mxu0 %v527
        %546 = vmatprep.subr.mxu0 0.0
        %547 = vmatpush1.msra.mxu0 %v526
        %548 = vmatprep.subr.mxu0 0.0
        %549 = vmatpush1.msra.mxu0 %v525
        %550 = vmatprep.subr.mxu0 0.0
        %551 = vmatpush1.msra.mxu0 %v524
        %552 = vmatprep.subr.mxu0 0.0
        %553 = vmatpush1.msra.mxu0 %v523
        %554 = vmatprep.subr.mxu0 0.0
        %555 = vmatpush1.msra.mxu0 %v522
        %556 = vmatprep.subr.mxu0 0.0
        %557 = vmatpush1.msra.mxu0 %v521
        %558 = vmatprep.subr.mxu0 0.0
        %559 = vmatpush1.msra.mxu0 %v520
        %560 = vmatprep.subr.mxu0 0.0
        %561 = vmatpush1.msra.mxu0 %v519
        %562 = vmatprep.subr.mxu0 0.0
        %563 = vmatpush1.msra.mxu0 %v518
        %564 = vmatprep.subr.mxu0 0.0
        %565 = vmatpush1.msra.mxu0 %v517
        %566 = vmatprep.subr.mxu0 0.0
        %567 = vmatpush1.msra.mxu0 %v516
        %568 = vmatprep.subr.mxu0 0.0
        %569 = vmatpush1.msra.mxu0 %v515
        %570 = vmatprep.subr.mxu0 0.0
        %571 = vmatpush2.msra.mxu0 0.0
        %572 = vmatprep.subr.mxu0 0.0
        %573 = vmatpush2.msra.mxu0 0.0
        %574 = vmatprep.subr.mxu0 0.0
        %575 = vmatpush2.msra.mxu0 0.0
        %576 = vmatprep.subr.mxu0 0.0
        %577 = vmatpush2.msra.mxu0 0.0
        %578 = vmatprep.subr.mxu0 0.0
        %579 = vmatpush2.msra.mxu0 0.0
        %580 = vmatprep.subr.mxu0 0.0
        %581 = vmatpush2.msra.mxu0 0.0
        %582 = vmatprep.subr.mxu0 0.0
        %583 = vmatpush2.msra.mxu0 0.0
        %584 = vmatprep.subr.mxu0 0.0
        %585 = vmatpush2.msra.mxu0 0.0
        %586 = vmatprep.subr.mxu0 0.0
        %587 = vmatpush2.msra.mxu0 0.0
        %588 = vmatprep.subr.mxu0 0.0
        %589 = vmatpush2.msra.mxu0 0.0
        %590 = vmatprep.subr.mxu0 0.0
        %591 = vmatpush2.msra.mxu0 0.0
        %592 = vmatprep.subr.mxu0 0.0
        %593 = vmatpush2.msra.mxu0 0.0
        %594 = vmatprep.subr.mxu0 0.0
        %595 = vmatpush2.msra.mxu0 0.0
        %596 = vmatprep.subr.mxu0 0.0
        %597 = vmatpush2.msra.mxu0 0.0
        %598 = vmatprep.subr.mxu0 0.0
        %599 = vmatpush2.msra.mxu0 0.0
        %600 = vmatprep.subr.mxu0 0.0
        %601 = vmatpush2.msra.mxu0 0.0
        %602 = vmatprep.mubr.f32.mxu0 0.0
        %603 = vmatmul.mubr.f32.gmra.mxu0 %v499
        %v604 = vpop.f32.mrf.mxu0
        %v605 = vadd.f32 %v536, %v604
        %v606 = vpop.f32.mrf.mxu0
        %607 = vmatprep.mubr.f32.mxu0 0.0
        %608 = vmatmul.mubr.f32.gmra.mxu0 %v500
        %v609 = vpop.f32.mrf.mxu0
        %v610 = vadd.f32 %v536, %v609
        %v611 = vpop.f32.mrf.mxu0
        %612 = vmatprep.mubr.f32.mxu0 0.0
        %613 = vmatmul.mubr.f32.gmra.mxu0 %v501
        %v614 = vpop.f32.mrf.mxu0
        %v615 = vadd.f32 %v536, %v614
        %v616 = vpop.f32.mrf.mxu0
        %617 = vmatprep.mubr.f32.mxu0 0.0
        %618 = vmatmul.mubr.f32.gmra.mxu0 %v502
        %v619 = vpop.f32.mrf.mxu0
        %v620 = vadd.f32 %v536, %v619
        %v621 = vpop.f32.mrf.mxu0
        %622 = vmatprep.mubr.f32.mxu0 0.0
        %623 = vmatmul.mubr.f32.gmra.mxu0 %v503
        %v624 = vpop.f32.mrf.mxu0
        %v625 = vadd.f32 %v536, %v624
        %v626 = vpop.f32.mrf.mxu0
        %627 = vmatprep.mubr.f32.mxu0 0.0
        %628 = vmatmul.mubr.f32.gmra.mxu0 %v504
        %v629 = vpop.f32.mrf.mxu0
        %v630 = vadd.f32 %v536, %v629
        %v631 = vpop.f32.mrf.mxu0
        %632 = vmatprep.mubr.f32.mxu0 0.0
        %633 = vmatmul.mubr.f32.gmra.mxu0 %v505
        %v634 = vpop.f32.mrf.mxu0
        %v635 = vadd.f32 %v536, %v634
        %v636 = vpop.f32.mrf.mxu0
        %637 = vmatprep.mubr.f32.mxu0 0.0
        %638 = vmatmul.mubr.f32.gmra.mxu0 %v506
        %v639 = vpop.f32.mrf.mxu0
        %v640 = vadd.f32 %v536, %v639
        %v641 = vpop.f32.mrf.mxu0
        %642 = vmatprep.mubr.f32.mxu0 0.0
        %643 = vmatmul.mubr.f32.gmra.mxu0 %v507
        %v644 = vpop.f32.mrf.mxu0
        %v645 = vadd.f32 %v536, %v644
        %v646 = vpop.f32.mrf.mxu0
        %647 = vmatprep.mubr.f32.mxu0 0.0
        %648 = vmatmul.mubr.f32.gmra.mxu0 %v508
        %v649 = vpop.f32.mrf.mxu0
        %v650 = vadd.f32 %v536, %v649
        %v651 = vpop.f32.mrf.mxu0
        %652 = vmatprep.mubr.f32.mxu0 0.0
        %653 = vmatmul.mubr.f32.gmra.mxu0 %v509
        %v654 = vpop.f32.mrf.mxu0
        %v655 = vadd.f32 %v536, %v654
        %v656 = vpop.f32.mrf.mxu0
        %657 = vmatprep.mubr.f32.mxu0 0.0
        %658 = vmatmul.mubr.f32.gmra.mxu0 %v510
        %v659 = vpop.f32.mrf.mxu0
        %v660 = vadd.f32 %v536, %v659
        %v661 = vpop.f32.mrf.mxu0
        %662 = vmatprep.mubr.f32.mxu0 0.0
        %663 = vmatmul.mubr.f32.gmra.mxu0 %v511
        %v664 = vpop.f32.mrf.mxu0
        %v665 = vadd.f32 %v536, %v664
        %v666 = vpop.f32.mrf.mxu0
        %667 = vmatprep.mubr.f32.mxu0 0.0
        %668 = vmatmul.mubr.f32.gmra.mxu0 %v512
        %v669 = vpop.f32.mrf.mxu0
        %v670 = vadd.f32 %v536, %v669
        %v671 = vpop.f32.mrf.mxu0
        %672 = vmatprep.mubr.f32.mxu0 0.0
        %673 = vmatmul.mubr.f32.gmra.mxu0 %v513
        %v674 = vpop.f32.mrf.mxu0
        %v675 = vadd.f32 %v536, %v674
        %v676 = vpop.f32.mrf.mxu0
        %677 = vmatprep.mubr.f32.mxu0 0.0
        %678 = vmatmul.mubr.f32.gmra.mxu0 %v514
        %v679 = vpop.f32.mrf.mxu0
        %v680 = vadd.f32 %v536, %v679
        %v681 = vpop.f32.mrf.mxu0
        %682 = vdwg.mxu0
        %v683 = vmax.f32 %v605, 0.0
        %v684 = vmax.f32 %v610, 0.0
        %v685 = vmax.f32 %v615, 0.0
        %v686 = vmax.f32 %v620, 0.0
        %v687 = vmax.f32 %v625, 0.0
        %v688 = vmax.f32 %v630, 0.0
        %v689 = vmax.f32 %v635, 0.0
        %v690 = vmax.f32 %v640, 0.0
        %v691 = vmax.f32 %v645, 0.0
        %v692 = vmax.f32 %v650, 0.0
        %v693 = vmax.f32 %v655, 0.0
        %v694 = vmax.f32 %v660, 0.0
        %v695 = vmax.f32 %v665, 0.0
        %v696 = vmax.f32 %v670, 0.0
        %v697 = vmax.f32 %v675, 0.0
        %v698 = vmax.f32 %v680, 0.0
        %v699 = vld [vmem:[%s5] sm:$0xff]
        %v700 = vld [vmem:[%s5 + $0x8] sm:$0xff]
        %v701 = vld [vmem:[%s5 + $0x10] sm:$0xff]
        %v702 = vld [vmem:[%s5 + $0x18] sm:$0xff]
        %v703 = vld [vmem:[%s5 + $0x20] sm:$0xff]
        %v704 = vld [vmem:[%s5 + $0x28] sm:$0xff]
        %v705 = vld [vmem:[%s5 + $0x30] sm:$0xff]
        %v706 = vld [vmem:[%s5 + $0x38] sm:$0xff]
        %v707 = vld [vmem:[%s5 + $0x40] sm:$0xff]
        %v708 = vld [vmem:[%s5 + $0x48] sm:$0xff]
        %v709 = vld [vmem:[%s5 + $0x50] sm:$0xff]
        %v710 = vld [vmem:[%s5 + $0x58] sm:$0xff]
        %v711 = vld [vmem:[%s5 + $0x60] sm:$0xff]
        %v712 = vld [vmem:[%s5 + $0x68] sm:$0xff]
        %v713 = vld [vmem:[%s5 + $0x70] sm:$0xff]
        %v714 = vld [vmem:[%s5 + $0x78] sm:$0xff]
        %v715 = vld [vmem:[%s6] sm:$0x1]
        %v717 = vlaneseq
        %v718 = vshrl.u32 %v717, 7
        %v719 = vsub.s32 0, %v718
        %v720 = vrot.slane %v715, %v719
        %722 = vmatprep.subr.mxu0 0.0
        %723 = vmatpush1.msra.mxu0 %v714
        %724 = vmatprep.subr.mxu0 0.0
        %725 = vmatpush1.msra.mxu0 %v713
        %726 = vmatprep.subr.mxu0 0.0
        %727 = vmatpush1.msra.mxu0 %v712
        %728 = vmatprep.subr.mxu0 0.0
        %729 = vmatpush1.msra.mxu0 %v711
        %730 = vmatprep.subr.mxu0 0.0
        %731 = vmatpush1.msra.mxu0 %v710
        %732 = vmatprep.subr.mxu0 0.0
        %733 = vmatpush1.msra.mxu0 %v709
        %734 = vmatprep.subr.mxu0 0.0
        %735 = vmatpush1.msra.mxu0 %v708
        %736 = vmatprep.subr.mxu0 0.0
        %737 = vmatpush1.msra.mxu0 %v707
        %738 = vmatprep.subr.mxu0 0.0
        %739 = vmatpush1.msra.mxu0 %v706
        %740 = vmatprep.subr.mxu0 0.0
        %741 = vmatpush1.msra.mxu0 %v705
        %742 = vmatprep.subr.mxu0 0.0
        %743 = vmatpush1.msra.mxu0 %v704
        %744 = vmatprep.subr.mxu0 0.0
        %745 = vmatpush1.msra.mxu0 %v703
        %746 = vmatprep.subr.mxu0 0.0
        %747 = vmatpush1.msra.mxu0 %v702
        %748 = vmatprep.subr.mxu0 0.0
        %749 = vmatpush1.msra.mxu0 %v701
        %750 = vmatprep.subr.mxu0 0.0
        %751 = vmatpush1.msra.mxu0 %v700
        %752 = vmatprep.subr.mxu0 0.0
        %753 = vmatpush1.msra.mxu0 %v699
        %754 = vmatprep.subr.mxu0 0.0
        %755 = vmatpush2.msra.mxu0 0.0
        %756 = vmatprep.subr.mxu0 0.0
        %757 = vmatpush2.msra.mxu0 0.0
        %758 = vmatprep.subr.mxu0 0.0
        %759 = vmatpush2.msra.mxu0 0.0
        %760 = vmatprep.subr.mxu0 0.0
        %761 = vmatpush2.msra.mxu0 0.0
        %762 = vmatprep.subr.mxu0 0.0
        %763 = vmatpush2.msra.mxu0 0.0
        %764 = vmatprep.subr.mxu0 0.0
        %765 = vmatpush2.msra.mxu0 0.0
        %766 = vmatprep.subr.mxu0 0.0
        %767 = vmatpush2.msra.mxu0 0.0
        %768 = vmatprep.subr.mxu0 0.0
        %769 = vmatpush2.msra.mxu0 0.0
        %770 = vmatprep.subr.mxu0 0.0
        %771 = vmatpush2.msra.mxu0 0.0
        %772 = vmatprep.subr.mxu0 0.0
        %773 = vmatpush2.msra.mxu0 0.0
        %774 = vmatprep.subr.mxu0 0.0
        %775 = vmatpush2.msra.mxu0 0.0
        %776 = vmatprep.subr.mxu0 0.0
        %777 = vmatpush2.msra.mxu0 0.0
        %778 = vmatprep.subr.mxu0 0.0
        %779 = vmatpush2.msra.mxu0 0.0
        %780 = vmatprep.subr.mxu0 0.0
        %781 = vmatpush2.msra.mxu0 0.0
        %782 = vmatprep.subr.mxu0 0.0
        %783 = vmatpush2.msra.mxu0 0.0
        %784 = vmatprep.subr.mxu0 0.0
        %785 = vmatpush2.msra.mxu0 0.0
        %786 = vmatprep.mubr.f32.mxu0 0.0
        %787 = vmatmul.mubr.f32.gmra.mxu0 %v683
        %v788 = vpop.f32.mrf.mxu0
        %v789 = vadd.f32 %v720, %v788
        %v790 = vpop.f32.mrf.mxu0
        %791 = vmatprep.mubr.f32.mxu0 0.0
        %792 = vmatmul.mubr.f32.gmra.mxu0 %v684
        %v793 = vpop.f32.mrf.mxu0
        %v794 = vadd.f32 %v720, %v793
        %v795 = vpop.f32.mrf.mxu0
        %796 = vmatprep.mubr.f32.mxu0 0.0
        %797 = vmatmul.mubr.f32.gmra.mxu0 %v685
        %v798 = vpop.f32.mrf.mxu0
        %v799 = vadd.f32 %v720, %v798
        %v800 = vpop.f32.mrf.mxu0
        %801 = vmatprep.mubr.f32.mxu0 0.0
        %802 = vmatmul.mubr.f32.gmra.mxu0 %v686
        %v803 = vpop.f32.mrf.mxu0
        %v804 = vadd.f32 %v720, %v803
        %v805 = vpop.f32.mrf.mxu0
        %806 = vmatprep.mubr.f32.mxu0 0.0
        %807 = vmatmul.mubr.f32.gmra.mxu0 %v687
        %v808 = vpop.f32.mrf.mxu0
        %v809 = vadd.f32 %v720, %v808
        %v810 = vpop.f32.mrf.mxu0
        %811 = vmatprep.mubr.f32.mxu0 0.0
        %812 = vmatmul.mubr.f32.gmra.mxu0 %v688
        %v813 = vpop.f32.mrf.mxu0
        %v814 = vadd.f32 %v720, %v813
        %v815 = vpop.f32.mrf.mxu0
        %816 = vmatprep.mubr.f32.mxu0 0.0
        %817 = vmatmul.mubr.f32.gmra.mxu0 %v689
        %v818 = vpop.f32.mrf.mxu0
        %v819 = vadd.f32 %v720, %v818
        %v820 = vpop.f32.mrf.mxu0
        %821 = vmatprep.mubr.f32.mxu0 0.0
        %822 = vmatmul.mubr.f32.gmra.mxu0 %v690
        %v823 = vpop.f32.mrf.mxu0
        %v824 = vadd.f32 %v720, %v823
        %v825 = vpop.f32.mrf.mxu0
        %826 = vmatprep.mubr.f32.mxu0 0.0
        %827 = vmatmul.mubr.f32.gmra.mxu0 %v691
        %v828 = vpop.f32.mrf.mxu0
        %v829 = vadd.f32 %v720, %v828
        %v830 = vpop.f32.mrf.mxu0
        %831 = vmatprep.mubr.f32.mxu0 0.0
        %832 = vmatmul.mubr.f32.gmra.mxu0 %v692
        %v833 = vpop.f32.mrf.mxu0
        %v834 = vadd.f32 %v720, %v833
        %v835 = vpop.f32.mrf.mxu0
        %836 = vmatprep.mubr.f32.mxu0 0.0
        %837 = vmatmul.mubr.f32.gmra.mxu0 %v693
        %v838 = vpop.f32.mrf.mxu0
        %v839 = vadd.f32 %v720, %v838
        %v840 = vpop.f32.mrf.mxu0
        %841 = vmatprep.mubr.f32.mxu0 0.0
        %842 = vmatmul.mubr.f32.gmra.mxu0 %v694
        %v843 = vpop.f32.mrf.mxu0
        %v844 = vadd.f32 %v720, %v843
        %v845 = vpop.f32.mrf.mxu0
        %846 = vmatprep.mubr.f32.mxu0 0.0
        %847 = vmatmul.mubr.f32.gmra.mxu0 %v695
        %v848 = vpop.f32.mrf.mxu0
        %v849 = vadd.f32 %v720, %v848
        %v850 = vpop.f32.mrf.mxu0
        %851 = vmatprep.mubr.f32.mxu0 0.0
        %852 = vmatmul.mubr.f32.gmra.mxu0 %v696
        %v853 = vpop.f32.mrf.mxu0
        %v854 = vadd.f32 %v720, %v853
        %v855 = vpop.f32.mrf.mxu0
        %856 = vmatprep.mubr.f32.mxu0 0.0
        %857 = vmatmul.mubr.f32.gmra.mxu0 %v697
        %v858 = vpop.f32.mrf.mxu0
        %v859 = vadd.f32 %v720, %v858
        %v860 = vpop.f32.mrf.mxu0
        %861 = vmatprep.mubr.f32.mxu0 0.0
        %862 = vmatmul.mubr.f32.gmra.mxu0 %v698
        %v863 = vpop.f32.mrf.mxu0
        %v864 = vadd.f32 %v720, %v863
        %v865 = vpop.f32.mrf.mxu0
        %866 = vdwg.mxu0
        %v867 = vtanh.pop %v789
        %v868 = vtanh.pop %v794
        %v869 = vtanh.pop %v799
        %v870 = vtanh.pop %v804
        %v871 = vtanh.pop %v809
        %v872 = vtanh.pop %v814
        %v873 = vtanh.pop %v819
        %v874 = vtanh.pop %v824
        %v875 = vtanh.pop %v829
        %v876 = vtanh.pop %v834
        %v877 = vtanh.pop %v839
        %v878 = vtanh.pop %v844
        %v879 = vtanh.pop %v849
        %v880 = vtanh.pop %v854
        %v881 = vtanh.pop %v859
        %v882 = vtanh.pop %v864
        %883 = vst [vmem:[%s272] sm:$0xff] %v867
        %884 = vst [vmem:[%s272 + $0x8] sm:$0xff] %v868
        %885 = vst [vmem:[%s272 + $0x10] sm:$0xff] %v869
        %886 = vst [vmem:[%s272 + $0x18] sm:$0xff] %v870
        %887 = vst [vmem:[%s272 + $0x20] sm:$0xff] %v871
        %888 = vst [vmem:[%s272 + $0x28] sm:$0xff] %v872
        %889 = vst [vmem:[%s272 + $0x30] sm:$0xff] %v873
        %890 = vst [vmem:[%s272 + $0x38] sm:$0xff] %v874
        %891 = vst [vmem:[%s272 + $0x40] sm:$0xff] %v875
        %892 = vst [vmem:[%s272 + $0x48] sm:$0xff] %v876
        %893 = vst [vmem:[%s272 + $0x50] sm:$0xff] %v877
        %894 = vst [vmem:[%s272 + $0x58] sm:$0xff] %v878
        %895 = vst [vmem:[%s272 + $0x60] sm:$0xff] %v879
        %896 = vst [vmem:[%s272 + $0x68] sm:$0xff] %v880
        %897 = vst [vmem:[%s272 + $0x70] sm:$0xff] %v881
        %898 = vst [vmem:[%s272 + $0x78] sm:$0xff] %v882
        %s899 = sand.u32 %s181, 1
        %s900 = scalar_lea.sflag [#allocation3], %s899
        %s901 = sand.u32 %s181, 1
        %s902 = smul.addr %s901, 128
        %s903 = scalar_lea.vmem [#allocation2], %s902
        // Predicated region
        $region49: #{tpu_custom_call.1} parent=47 // pred_check
          %p904 = pneg %p191
        $region50: #{tpu_custom_call.1} parent=47 // pred_check_branch
          %906 = sbr.rel (%p904) target = $region52
        $region51: #{tpu_custom_call.1} parent=47 // pred_region
          %s907 = smul.u32 16, %s21
          %s909 = ssub.s32 2048, 2048
          %910 = vsyncadd %s900, %s909
          %s911 = smul.addr %s907, 128
          %s912 = scalar_lea.hbm %s7, %s911
          %s913 = sshll.u32 %s903, 4
          %s914 = int_to_ptr.vmem [resolvable:$true] %s913
          %919 = dma.vmem_to_hbm [thread:$0]  %s914, 2048, %s912, %s900, 128, 128, 8
        $region52: #{tpu_custom_call.1} parent=47 // pred_fallthru
          _
      $region48: #{tpu_custom_call.1} parent=5 // pred_fallthru
        _
      %p920 = scmp.le.s32.totalorder 2, %s16
      // Predicated region
      $region53: #{tpu_custom_call.1} parent=5 // pred_check
        %p921 = pneg %p920
      $region54: #{tpu_custom_call.1} parent=5 // pred_check_branch
        %923 = sbr.rel (%p921) target = $region56
      $region55: #{tpu_custom_call.1} parent=5 // pred_region
        %s924 = ssub.s32 %s16, 2
        // Predicated region
        $region57: #{tpu_custom_call.1} parent=55 // pred_check
          %p925 = pneg %p197
        $region58: #{tpu_custom_call.1} parent=55 // pred_check_branch
          %927 = sbr.rel (%p925) target = $region60
        $region59: #{tpu_custom_call.1} parent=55 // pred_region
          %s928 = sand.u32 %s182, 1
          %s929 = scalar_lea.sflag [#allocation3], %s928
          %s930 = sand.u32 %s182, 1
          %s931 = smul.addr %s930, 128
          %s932 = scalar_lea.vmem [#allocation2], %s931
          %933 = dma.done %s929, 2048
        $region60: #{tpu_custom_call.1} parent=55 // pred_fallthru
          _
      $region56: #{tpu_custom_call.1} parent=5 // pred_fallthru
        _
    $region6: #{tpu_custom_call.1} parent=1 // loop_footer
      %s20 = sadd.s32 1, %s16
    $region7: #{tpu_custom_call.1} parent=1 // loop_footer_branch
      %15 = sbr.rel target = $region3
    $region8: #{tpu_custom_call.1} parent=1 // loop_exit
      _
    %934 = vsyncpa [#allocation3], 1
    %s935 = scalar_lea.sflag [#allocation3], 1
    %936 = vsyncpa %s935, 1

</llo_original>
